<compile_context>
chip_gen: v7x
topology: tpu7x:2x2x1
jax: 0.10.0
libtpu: 0.0.40
codegen_flags: <defaults>
</compile_context>

<pallas_src>
import numpy as np
import jax
import jax.numpy as jnp
from jax.experimental import pallas as pl
from jax.experimental.pallas import tpu as pltpu


def _copy_kernel(x_ref, o_ref):
    # Pure lane-dense tile copy; the flatten already happened (metadata) in
    # the wrapper, so this is an unmasked vld/vst stream at HBM bandwidth.
    o_ref[...] = x_ref[...]


# Per-buffer tile byte budget. With default double-buffering of input and
# output this uses ~4x this much VMEM, well under every generation's scoped
# default (16/32/32 MiB on v5e/v6e/v7x).
_MAX_TILE_BYTES = 4 * 1024 * 1024


def _pick_tiles(B: int, flat: int, itemsize: int):
    # Lane-axis tile: full extent when small (always legal), else a large
    # multiple of 128 so stores stay unmasked (ragged last tile is masked
    # only on the final grid step).
    if flat <= 4096:
        TF = flat
    else:
        TF = 4096

    # Sublane-axis tile: full extent when it fits the budget (always legal),
    # else the largest multiple of 8 that fits.
    max_tb = max(1, _MAX_TILE_BYTES // max(1, TF * itemsize))
    if B <= max_tb:
        TB = B
    else:
        TB = max(8, (max_tb // 8) * 8)
    return TB, TF


def squash_dims(x: jax.Array, ndims_in: int = 3) -> jax.Array:
    """Pallas equivalent of torchrl SquashDims(ndims_in).forward(x)."""
    if x.ndim < ndims_in:
        raise ValueError(f"input has {x.ndim} dims, need at least {ndims_in}")

    lead = x.shape[:-ndims_in]
    tail = x.shape[-ndims_in:]
    flat = int(np.prod(tail))
    out_shape = lead + (flat,)

    # The flatten is metadata: collapse leading dims to B and trailing dims to
    # flat *before* the kernel so the kernel sees a 2D lane-dense layout.
    B = int(np.prod(lead)) if lead else 1
    x2 = x.reshape((B, flat))

    TB, TF = _pick_tiles(B, flat, x.dtype.itemsize)
    grid = (pl.cdiv(B, TB), pl.cdiv(flat, TF))

    out = pl.pallas_call(
        _copy_kernel,
        out_shape=jax.ShapeDtypeStruct((B, flat), x.dtype),
        grid_spec=pltpu.PrefetchScalarGridSpec(
            num_scalar_prefetch=0,
            grid=grid,
            in_specs=[pl.BlockSpec((TB, TF), lambda i, j: (i, j))],
            out_specs=pl.BlockSpec((TB, TF), lambda i, j: (i, j)),
        ),
        compiler_params=pltpu.CompilerParams(
            # Pure independent copy: both axes parallel (v7x megacore sharding;
            # harmless on single-TC v5e/v6e).
            dimension_semantics=("parallel", "parallel"),
        ),
    )(x2)

    # Restore the original leading dims (metadata only).
    return out.reshape(out_shape)


if __name__ == "__main__":
    key = jax.random.PRNGKey(0)

    # Primary test: small conv-like NCHW input, ndims_in=3.
    x = jax.random.normal(key, (2, 4, 16, 16), dtype=jnp.float32)
    y = jax.block_until_ready(squash_dims(x, ndims_in=3))
    y_ref = x.reshape(x.shape[:-3] + (-1,))
    assert y.shape == (2, 4 * 16 * 16), y.shape
    assert y.dtype == x.dtype
    np.testing.assert_array_equal(np.asarray(y), np.asarray(y_ref))

    # Extra checks: non-multiple-of-(8,128) extents and a different ndims_in.
    x2 = jax.random.normal(key, (3, 5, 7, 9), dtype=jnp.float32)
    y2 = jax.block_until_ready(squash_dims(x2, ndims_in=2))
    np.testing.assert_array_equal(
        np.asarray(y2), np.asarray(x2.reshape(3, 5, 7 * 9))
    )

    x3 = jax.random.normal(key, (16, 8, 32, 32), dtype=jnp.bfloat16)
    y3 = jax.block_until_ready(squash_dims(x3, ndims_in=3))
    np.testing.assert_array_equal(
        np.asarray(y3), np.asarray(x3.reshape(16, 8 * 32 * 32))
    )

    print("KERNEL_OK")
</pallas_src>

<mosaic_0001>
module attributes {stable_mosaic.version = 11 : i64} {
  func.func @_copy_kernel(%arg0: i32, %arg1: i32, %arg2: memref<2x1024xf32, #tpu.memory_space<vmem>>, %arg3: memref<2x1024xf32, #tpu.memory_space<vmem>>) attributes {dimension_semantics = [#tpu.dimension_semantics<parallel>, #tpu.dimension_semantics<parallel>], iteration_bounds = array<i64: 1, 1>, scalar_prefetch = 0 : i64, scratch_operands = 0 : i64, tpu.core_type = #tpu.core_type<tc>, window_params = [{transform_indices = @transform_0, window_bounds = array<i64: 2, 1024>}, {transform_indices = @transform_1, window_bounds = array<i64: 2, 1024>}]} {
    %c0 = arith.constant 0 : index
    %c0_0 = arith.constant 0 : index
    %0 = vector.load %arg2[%c0, %c0_0] : memref<2x1024xf32, #tpu.memory_space<vmem>>, vector<2x1024xf32>
    %c0_1 = arith.constant 0 : index
    %c0_2 = arith.constant 0 : index
    %1 = vector.load %arg3[%c0_1, %c0_2] : memref<2x1024xf32, #tpu.memory_space<vmem>>, vector<2x1024xf32>
    tpu.vector_store %arg3[%c0_1, %c0_2], %0 {strides = array<i32>} : memref<2x1024xf32, #tpu.memory_space<vmem>>, vector<2x1024xf32>,
    return
  }
  func.func @transform_0(%arg0: i32, %arg1: i32) -> (i32, i32) {
    %c0_i32 = arith.constant 0 : i32
    return %arg0, %arg1 : i32, i32
  }
  func.func @transform_1(%arg0: i32, %arg1: i32) -> (i32, i32) {
    %c0_i32 = arith.constant 0 : i32
    return %arg0, %arg1 : i32, i32
  }
}

</mosaic_0001>

<llo_original>
// kernel: tpu_custom_call.1
$region0: #{tpu_custom_call.1}
  #allocation0 [shape = 'u32[]', space=smem, size = 0x4, offset = 0x4, fixed_abs, tag = 'smem constant byte address 0x4 - core index']
  #allocation1 [shape = 'u32[144,128]{1,0:T(1,128)}', space=vmem, size = 0x12000, scoped, tag = 'internal scratch']
  %s0 = inlined_call_operand.hbm [shape: f32[2,1024], index: 0, kind: input, shape index: {}]
  %s1 = inlined_call_operand.hbm [shape: f32[2,1024], index: 1, kind: output, shape index: {}]
  %s2 = sld [smem:[#allocation0]]
  $region18: #{tpu_custom_call.1} parent=0
    _
  %s4 = ssub.s32 1, %s2
  %s5 = scalar_select 0, %s4, %s2
  $region1: #{tpu_custom_call.1} parent=0
    #allocation2 [shape = 'u8[8192]{0}', space=vmem, size = 0x2000, scoped, tag = 'input window, operand 0, single buffered']
    #allocation3 [shape = 's32[1]{0}', space=sflag, size = 0x4, scoped, tag = 'scoped memory for tpu_custom_call.1']
    #allocation4 [shape = 's32[1]{0}', space=sflag, size = 0x4, scoped, tag = 'scoped memory for tpu_custom_call.1']
    #allocation5 [shape = 'u8[8192]{0}', space=vmem, size = 0x2000, scoped, tag = 'output window, operand 0, single buffered']
    %6 = vsyncpa [#allocation3], 0
    %7 = vsyncpa [#allocation4], 0
    // Predicated region
    $region2: #{tpu_custom_call.1} parent=1 // pred_check
      _
    $region3: #{tpu_custom_call.1} parent=1 // pred_check_branch
      %9 = sbr.rel (0) target = $region5
    $region4: #{tpu_custom_call.1} parent=1 // pred_region
      %s11 = ssub.s32 256, 256
      %12 = vsyncadd [#allocation3], %s11
      %s14 = sshll.u32 [#allocation2], 4
      %s15 = int_to_ptr.vmem [resolvable:$true] %s14
      %17 = dma.hbm_to_vmem [thread:$0]  %s0, 256, %s15, [#allocation3]
    $region5: #{tpu_custom_call.1} parent=1 // pred_fallthru
      _
    // Predicated region
    $region6: #{tpu_custom_call.1} parent=1 // pred_check
      _
    $region7: #{tpu_custom_call.1} parent=1 // pred_check_branch
      %19 = sbr.rel (0) target = $region9
    $region8: #{tpu_custom_call.1} parent=1 // pred_region
      %20 = dma.done [#allocation3], 256
    $region9: #{tpu_custom_call.1} parent=1 // pred_fallthru
      _
    %v21 = vld [vmem:[#allocation2] sm:$0xff]
    %v22 = vld [vmem:[#allocation2 + $0x8] sm:$0xff]
    %23 = vst [vmem:[#allocation5] sm:$0xff] %v21
    %24 = vst [vmem:[#allocation5 + $0x8] sm:$0xff] %v22
    // Predicated region
    $region10: #{tpu_custom_call.1} parent=1 // pred_check
      _
    $region11: #{tpu_custom_call.1} parent=1 // pred_check_branch
      %26 = sbr.rel (0) target = $region13
    $region12: #{tpu_custom_call.1} parent=1 // pred_region
      %s28 = ssub.s32 256, 256
      %29 = vsyncadd [#allocation4], %s28
      %s31 = sshll.u32 [#allocation5], 4
      %s32 = int_to_ptr.vmem [resolvable:$true] %s31
      %34 = dma.vmem_to_hbm [thread:$0]  %s32, 256, %s1, [#allocation4]
    $region13: #{tpu_custom_call.1} parent=1 // pred_fallthru
      _
    // Predicated region
    $region14: #{tpu_custom_call.1} parent=1 // pred_check
      _
    $region15: #{tpu_custom_call.1} parent=1 // pred_check_branch
      %36 = sbr.rel (0) target = $region17
    $region16: #{tpu_custom_call.1} parent=1 // pred_region
      %37 = dma.done [#allocation4], 256
    $region17: #{tpu_custom_call.1} parent=1 // pred_fallthru
      _
    %38 = vsyncpa [#allocation3], 1
    %39 = vsyncpa [#allocation4], 1

</llo_original>
